<compile_context>
chip_gen: v6e
topology: v6e:2x2x1
jax: 0.10.0
libtpu: 0.0.40
codegen_flags: <defaults>
</compile_context>

<pallas_src>
import jax
import jax.numpy as jnp
from jax.experimental import pallas as pl
from jax.experimental.pallas import tpu as pltpu


def highway2_kernel(x_ref, wca_ref, bca_ref, wcb_ref, bcb_ref, o_ref):
    D = x_ref.shape[-1]

    def layer(x_f32, x_native, w_ref, b_ref):
        # One fused matmul: (tm, D) @ (D, 2D) -> (tm, 2D), f32 accum on MXU.
        h = jnp.dot(x_native, w_ref[...],
                    preferred_element_type=jnp.float32) + b_ref[...]
        t = 0.5 * jnp.tanh(0.5 * h[:, :D]) + 0.5   # sigmoid, single EUP push
        g = jnp.maximum(h[:, D:], 0.0)             # relu candidate
        # t*g + (1-t)*x  ==  x + t*(g - x)   (one fewer VPU mul)
        return x_f32 + t * (g - x_f32)

    x = x_ref[...]                                  # (tm, D), native dtype
    xf = x.astype(jnp.float32)
    y1 = layer(xf, x, wca_ref, bca_ref)             # highway1, stays in VMEM
    y2 = layer(y1, y1.astype(x.dtype), wcb_ref, bcb_ref)   # highway2
    o_ref[...] = y2.astype(o_ref.dtype)


def highway_x2(x, w1a, b1a, w2a, b2a, w1b, b1b, w2b, b2b, *, tm=512):
    """Two stacked Highway layers (CharLM.highway1 -> highway2) in one call.

    x: (N, D).  w*: (D, D) in nn.Linear (out, in) layout.  b*: (D,).
    Layer a: (w1a, b1a) = fc1 (gate), (w2a, b2a) = fc2 (candidate); layer b
    likewise.  dtype of x/weights flows through (bf16 recommended on TPU);
    accumulation and gating are f32.
    """
    N, D = x.shape
    dt = x.dtype

    # Pre-transpose + fuse each layer's two linears once, outside the kernel.
    wca = jnp.concatenate([w1a.T, w2a.T], axis=1).astype(dt)       # (D, 2D)
    wcb = jnp.concatenate([w1b.T, w2b.T], axis=1).astype(dt)       # (D, 2D)
    bca = jnp.concatenate([b1a, b2a]).reshape(1, 2 * D).astype(jnp.float32)
    bcb = jnp.concatenate([b1b, b2b]).reshape(1, 2 * D).astype(jnp.float32)

    # Row tile: large (mem-bound kernel), a multiple of the sublane tile,
    # clamped for tiny N.  Ragged N is handled by the pipeline's masked
    # partial last block -- no wrapper pad / slice HBM copies.
    sub = 8 if dt == jnp.float32 else 16
    tm = max(sub, min(tm, pl.cdiv(N, sub) * sub))
    tm = (tm // sub) * sub
    grid = pl.cdiv(N, tm)

    return pl.pallas_call(
        highway2_kernel,
        out_shape=jax.ShapeDtypeStruct((N, D), dt),
        grid_spec=pltpu.PrefetchScalarGridSpec(
            num_scalar_prefetch=0,
            grid=(grid,),
            in_specs=[
                pl.BlockSpec((tm, D), lambda i: (i, 0)),      # x row tile
                pl.BlockSpec((D, 2 * D), lambda i: (0, 0)),   # layer-1 W (resident)
                pl.BlockSpec((1, 2 * D), lambda i: (0, 0)),   # layer-1 bias
                pl.BlockSpec((D, 2 * D), lambda i: (0, 0)),   # layer-2 W (resident)
                pl.BlockSpec((1, 2 * D), lambda i: (0, 0)),   # layer-2 bias
            ],
            out_specs=pl.BlockSpec((tm, D), lambda i: (i, 0)),
        ),
        compiler_params=pltpu.CompilerParams(
            dimension_semantics=("parallel",),        # megacore row-sharding
            vmem_limit_bytes=16 * 1024 * 1024,        # real footprint < 3 MB
        ),
    )(x, wca, bca, wcb, bcb)


def highway_ref(x, w1, b1, w2, b2):
    t = jax.nn.sigmoid(x @ w1.T + b1)
    return t * jnp.maximum(x @ w2.T + b2, 0.0) + (1.0 - t) * x


if __name__ == "__main__":
    key = jax.random.PRNGKey(0)

    # Small shapes consistent with CharLM: batch=2, seq=10 -> N = batch*seq
    # flattened word positions; highway feature dim D=128 (lane-aligned).
    B, S, D = 2, 10, 128
    N = B * S

    keys = jax.random.split(key, 10)
    x = jax.random.normal(keys[0], (N, D), dtype=jnp.float32)

    bound = 1.0 / (D ** 0.5)   # nn.Linear default init: U(-1/sqrt(D), 1/sqrt(D))

    def mk_layer(kw1, kb1, kw2, kb2):
        return (jax.random.uniform(kw1, (D, D), jnp.float32, -bound, bound),
                jax.random.uniform(kb1, (D,), jnp.float32, -bound, bound),
                jax.random.uniform(kw2, (D, D), jnp.float32, -bound, bound),
                jax.random.uniform(kb2, (D,), jnp.float32, -bound, bound))

    l1 = mk_layer(*keys[1:5])   # CharLM.highway1
    l2 = mk_layer(*keys[5:9])   # CharLM.highway2

    # --- f32 path: N=20 exercises the single ragged partial block. ---
    y = highway_x2(x, *l1, *l2)
    y = jax.block_until_ready(y)
    ref = highway_ref(highway_ref(x, *l1), *l2)
    assert y.shape == (N, D)
    assert jnp.allclose(y, ref, atol=1e-4, rtol=1e-4), "f32 mismatch vs reference"

    # --- bf16 path (recommended perf config on v5e/v6e/v7x): multi-step grid
    #     (tm=512 -> 2 steps) plus a ragged tail; f32 accumulation inside. ---
    N2 = 1000
    x2 = jax.random.normal(keys[9], (N2, D), dtype=jnp.float32)
    y2 = highway_x2(x2.astype(jnp.bfloat16),
                    *[p.astype(jnp.bfloat16) for p in l1],
                    *[p.astype(jnp.bfloat16) for p in l2])
    y2 = jax.block_until_ready(y2)
    ref2 = highway_ref(highway_ref(x2, *l1), *l2)
    assert y2.shape == (N2, D)
    assert jnp.allclose(y2.astype(jnp.float32), ref2, atol=8e-2, rtol=8e-2), \
        "bf16 mismatch vs f32 reference"

    print("KERNEL_OK")
</pallas_src>

<mosaic_0001>
module attributes {stable_mosaic.version = 11 : i64} {
  func.func @highway2_kernel(%arg0: i32, %arg1: memref<24x128xf32, #tpu.memory_space<vmem>>, %arg2: memref<128x256xf32, #tpu.memory_space<vmem>>, %arg3: memref<1x256xf32, #tpu.memory_space<vmem>>, %arg4: memref<128x256xf32, #tpu.memory_space<vmem>>, %arg5: memref<1x256xf32, #tpu.memory_space<vmem>>, %arg6: memref<24x128xf32, #tpu.memory_space<vmem>>) attributes {dimension_semantics = [#tpu.dimension_semantics<parallel>], iteration_bounds = array<i64: 1>, scalar_prefetch = 0 : i64, scratch_operands = 0 : i64, tpu.core_type = #tpu.core_type<tc>, window_params = [{transform_indices = @transform_0, window_bounds = array<i64: 24, 128>}, {pipeline_mode = #tpu.pipeline_mode<synchronous>, transform_indices = @transform_1, window_bounds = array<i64: 128, 256>}, {pipeline_mode = #tpu.pipeline_mode<synchronous>, transform_indices = @transform_2, window_bounds = array<i64: 1, 256>}, {pipeline_mode = #tpu.pipeline_mode<synchronous>, transform_indices = @transform_3, window_bounds = array<i64: 128, 256>}, {pipeline_mode = #tpu.pipeline_mode<synchronous>, transform_indices = @transform_4, window_bounds = array<i64: 1, 256>}, {transform_indices = @transform_5, window_bounds = array<i64: 24, 128>}]} {
    %c0 = arith.constant 0 : index
    %c0_0 = arith.constant 0 : index
    %0 = vector.load %arg1[%c0, %c0_0] : memref<24x128xf32, #tpu.memory_space<vmem>>, vector<24x128xf32>
    %c0_1 = arith.constant 0 : index
    %c0_2 = arith.constant 0 : index
    %1 = vector.load %arg2[%c0_1, %c0_2] : memref<128x256xf32, #tpu.memory_space<vmem>>, vector<128x256xf32>
    %cst = arith.constant dense<0.000000e+00> : vector<24x256xf32>
    %2 = tpu.matmul %0, %1, %cst {dimension_numbers = #tpu.dot_dimension_numbers<[1], [0], [0], [1], [0, 0, 1, 1], [], []>} : vector<24x128xf32>, vector<128x256xf32>, vector<24x256xf32> -> vector<24x256xf32>
    %c0_3 = arith.constant 0 : index
    %c0_4 = arith.constant 0 : index
    %3 = vector.load %arg3[%c0_3, %c0_4] : memref<1x256xf32, #tpu.memory_space<vmem>>, vector<1x256xf32>
    %4 = vector.broadcast %3 : vector<1x256xf32> to vector<24x256xf32>
    %5 = arith.addf %2, %4 : vector<24x256xf32>
    %6 = vector.extract_strided_slice %5 {offsets = [0, 0], sizes = [24, 128], strides = [1, 1]} : vector<24x256xf32> to vector<24x128xf32>
    %cst_5 = arith.constant 5.000000e-01 : f32
    %7 = vector.broadcast %cst_5 : f32 to vector<24x128xf32>
    %8 = arith.mulf %7, %6 : vector<24x128xf32>
    %9 = math.tanh %8 : vector<24x128xf32>
    %cst_6 = arith.constant 5.000000e-01 : f32
    %10 = vector.broadcast %cst_6 : f32 to vector<24x128xf32>
    %11 = arith.mulf %10, %9 : vector<24x128xf32>
    %cst_7 = arith.constant 5.000000e-01 : f32
    %12 = vector.broadcast %cst_7 : f32 to vector<24x128xf32>
    %13 = arith.addf %11, %12 : vector<24x128xf32>
    %14 = vector.extract_strided_slice %5 {offsets = [0, 128], sizes = [24, 128], strides = [1, 1]} : vector<24x256xf32> to vector<24x128xf32>
    %cst_8 = arith.constant 0.000000e+00 : f32
    %15 = vector.broadcast %cst_8 : f32 to vector<24x128xf32>
    %16 = arith.maximumf %14, %15 : vector<24x128xf32>
    %17 = arith.subf %16, %0 : vector<24x128xf32>
    %18 = arith.mulf %13, %17 : vector<24x128xf32>
    %19 = arith.addf %0, %18 : vector<24x128xf32>
    %c0_9 = arith.constant 0 : index
    %c0_10 = arith.constant 0 : index
    %20 = vector.load %arg4[%c0_9, %c0_10] : memref<128x256xf32, #tpu.memory_space<vmem>>, vector<128x256xf32>
    %cst_11 = arith.constant dense<0.000000e+00> : vector<24x256xf32>
    %21 = tpu.matmul %19, %20, %cst_11 {dimension_numbers = #tpu.dot_dimension_numbers<[1], [0], [0], [1], [0, 0, 1, 1], [], []>} : vector<24x128xf32>, vector<128x256xf32>, vector<24x256xf32> -> vector<24x256xf32>
    %c0_12 = arith.constant 0 : index
    %c0_13 = arith.constant 0 : index
    %22 = vector.load %arg5[%c0_12, %c0_13] : memref<1x256xf32, #tpu.memory_space<vmem>>, vector<1x256xf32>
    %23 = vector.broadcast %22 : vector<1x256xf32> to vector<24x256xf32>
    %24 = arith.addf %21, %23 : vector<24x256xf32>
    %25 = vector.extract_strided_slice %24 {offsets = [0, 0], sizes = [24, 128], strides = [1, 1]} : vector<24x256xf32> to vector<24x128xf32>
    %cst_14 = arith.constant 5.000000e-01 : f32
    %26 = vector.broadcast %cst_14 : f32 to vector<24x128xf32>
    %27 = arith.mulf %26, %25 : vector<24x128xf32>
    %28 = math.tanh %27 : vector<24x128xf32>
    %cst_15 = arith.constant 5.000000e-01 : f32
    %29 = vector.broadcast %cst_15 : f32 to vector<24x128xf32>
    %30 = arith.mulf %29, %28 : vector<24x128xf32>
    %cst_16 = arith.constant 5.000000e-01 : f32
    %31 = vector.broadcast %cst_16 : f32 to vector<24x128xf32>
    %32 = arith.addf %30, %31 : vector<24x128xf32>
    %33 = vector.extract_strided_slice %24 {offsets = [0, 128], sizes = [24, 128], strides = [1, 1]} : vector<24x256xf32> to vector<24x128xf32>
    %cst_17 = arith.constant 0.000000e+00 : f32
    %34 = vector.broadcast %cst_17 : f32 to vector<24x128xf32>
    %35 = arith.maximumf %33, %34 : vector<24x128xf32>
    %36 = arith.subf %35, %19 : vector<24x128xf32>
    %37 = arith.mulf %32, %36 : vector<24x128xf32>
    %38 = arith.addf %19, %37 : vector<24x128xf32>
    %c0_18 = arith.constant 0 : index
    %c0_19 = arith.constant 0 : index
    %39 = vector.load %arg6[%c0_18, %c0_19] : memref<24x128xf32, #tpu.memory_space<vmem>>, vector<24x128xf32>
    tpu.vector_store %arg6[%c0_18, %c0_19], %38 {strides = array<i32>} : memref<24x128xf32, #tpu.memory_space<vmem>>, vector<24x128xf32>,
    return
  }
  func.func @transform_0(%arg0: i32) -> (i32, i32) {
    %c0_i32 = arith.constant 0 : i32
    %c0_i32_0 = arith.constant 0 : i32
    return %arg0, %c0_i32 : i32, i32
  }
  func.func @transform_1(%arg0: i32) -> (i32, i32) {
    %c0_i32 = arith.constant 0 : i32
    %c0_i32_0 = arith.constant 0 : i32
    %c0_i32_1 = arith.constant 0 : i32
    return %c0_i32, %c0_i32_0 : i32, i32
  }
  func.func @transform_2(%arg0: i32) -> (i32, i32) {
    %c0_i32 = arith.constant 0 : i32
    %c0_i32_0 = arith.constant 0 : i32
    %c0_i32_1 = arith.constant 0 : i32
    return %c0_i32, %c0_i32_0 : i32, i32
  }
  func.func @transform_3(%arg0: i32) -> (i32, i32) {
    %c0_i32 = arith.constant 0 : i32
    %c0_i32_0 = arith.constant 0 : i32
    %c0_i32_1 = arith.constant 0 : i32
    return %c0_i32, %c0_i32_0 : i32, i32
  }
  func.func @transform_4(%arg0: i32) -> (i32, i32) {
    %c0_i32 = arith.constant 0 : i32
    %c0_i32_0 = arith.constant 0 : i32
    %c0_i32_1 = arith.constant 0 : i32
    return %c0_i32, %c0_i32_0 : i32, i32
  }
  func.func @transform_5(%arg0: i32) -> (i32, i32) {
    %c0_i32 = arith.constant 0 : i32
    %c0_i32_0 = arith.constant 0 : i32
    return %arg0, %c0_i32 : i32, i32
  }
}

</mosaic_0001>

<llo_original>
// kernel: tpu_custom_call.1
$region0: #{tpu_custom_call.1}
  #allocation0 [shape = 'u32[]', space=smem, size = 0x4, offset = 0x4, fixed_abs, tag = 'smem constant byte address 0x4 - core index']
  #allocation1 [shape = 'u32[144,128]{1,0:T(1,128)}', space=vmem, size = 0x12000, scoped, tag = 'internal scratch']
  %s0 = inlined_call_operand.hbm [shape: f32[20,128], index: 0, kind: input, shape index: {}]
  %s1 = inlined_call_operand.hbm [shape: f32[128,256], index: 1, kind: input, shape index: {}]
  %s2 = inlined_call_operand.vmem [shape: f32[1,256], index: 2, kind: input, shape index: {}]
  %s3 = inlined_call_operand.hbm [shape: f32[128,256], index: 3, kind: input, shape index: {}]
  %s4 = inlined_call_operand.vmem [shape: f32[1,256], index: 4, kind: input, shape index: {}]
  %s5 = inlined_call_operand.hbm [shape: f32[20,128], index: 5, kind: output, shape index: {}]
  %s6 = sld [smem:[#allocation0]]
  $region42: #{tpu_custom_call.1} parent=0
    _
  %s8 = ssub.s32 1, %s6
  %s9 = scalar_select 0, %s8, %s6
  $region1: #{tpu_custom_call.1} parent=0
    #allocation2 [shape = 'u8[12288]{0}', space=vmem, size = 0x3000, scoped, tag = 'input window, operand 0, single buffered']
    #allocation3 [shape = 's32[1]{0}', space=sflag, size = 0x4, scoped, tag = 'scoped memory for tpu_custom_call.1']
    #allocation4 [shape = 's32[1]{0}', space=sflag, size = 0x4, scoped, tag = 'scoped memory for tpu_custom_call.1']
    #allocation5 [shape = 'u8[131072]{0}', space=vmem, size = 0x20000, scoped, tag = 'input window, operand 1, single buffered']
    #allocation6 [shape = 's32[1]{0}', space=sflag, size = 0x4, scoped, tag = 'scoped memory for tpu_custom_call.1']
    #allocation7 [shape = 'u8[131072]{0}', space=vmem, size = 0x20000, scoped, tag = 'input window, operand 3, single buffered']
    #allocation8 [shape = 'u8[12288]{0}', space=vmem, size = 0x3000, scoped, tag = 'output window, operand 0, single buffered']
    %10 = vsyncpa [#allocation3], 0
    %11 = vsyncpa [#allocation6], 0
    %12 = vsyncpa [#allocation4], 0
    // Predicated region
    $region2: #{tpu_custom_call.1} parent=1 // pred_check
      _
    $region3: #{tpu_custom_call.1} parent=1 // pred_check_branch
      %14 = sbr.rel (0) target = $region5
    $region4: #{tpu_custom_call.1} parent=1 // pred_region
      %s16 = ssub.s32 384, 384
      %17 = vsyncadd [#allocation3], %s16
      %s18 = sshll.u32 [#allocation2], 4
      %s19 = int_to_ptr.vmem [resolvable:$true] %s18
      %24 = dma.hbm_to_vmem [thread:$0]  %s0, 384, %s19, [#allocation3], 128, 128, 8
    $region5: #{tpu_custom_call.1} parent=1 // pred_fallthru
      _
    // Predicated region
    $region6: #{tpu_custom_call.1} parent=1 // pred_check
      _
    $region7: #{tpu_custom_call.1} parent=1 // pred_check_branch
      %26 = sbr.rel (0) target = $region9
    $region8: #{tpu_custom_call.1} parent=1 // pred_region
      %s28 = ssub.s32 4096, 4096
      %29 = vsyncadd [#allocation6], %s28
      %s30 = sshll.u32 [#allocation5], 4
      %s31 = int_to_ptr.vmem [resolvable:$true] %s30
      %36 = dma.hbm_to_vmem [thread:$0]  %s1, 4096, %s31, [#allocation6], 256, 256, 16
    $region9: #{tpu_custom_call.1} parent=1 // pred_fallthru
      _
    // Predicated region
    $region10: #{tpu_custom_call.1} parent=1 // pred_check
      _
    $region11: #{tpu_custom_call.1} parent=1 // pred_check_branch
      %38 = sbr.rel (0) target = $region13
    $region12: #{tpu_custom_call.1} parent=1 // pred_region
      _
    $region13: #{tpu_custom_call.1} parent=1 // pred_fallthru
      _
    // Predicated region
    $region14: #{tpu_custom_call.1} parent=1 // pred_check
      _
    $region15: #{tpu_custom_call.1} parent=1 // pred_check_branch
      %40 = sbr.rel (0) target = $region17
    $region16: #{tpu_custom_call.1} parent=1 // pred_region
      %s42 = ssub.s32 4096, 4096
      %43 = vsyncadd [#allocation6], %s42
      %s44 = sshll.u32 [#allocation7], 4
      %s45 = int_to_ptr.vmem [resolvable:$true] %s44
      %50 = dma.hbm_to_vmem [thread:$0]  %s3, 4096, %s45, [#allocation6], 256, 256, 16
    $region17: #{tpu_custom_call.1} parent=1 // pred_fallthru
      _
    // Predicated region
    $region18: #{tpu_custom_call.1} parent=1 // pred_check
      _
    $region19: #{tpu_custom_call.1} parent=1 // pred_check_branch
      %52 = sbr.rel (0) target = $region21
    $region20: #{tpu_custom_call.1} parent=1 // pred_region
      _
    $region21: #{tpu_custom_call.1} parent=1 // pred_fallthru
      _
    // Predicated region
    $region22: #{tpu_custom_call.1} parent=1 // pred_check
      _
    $region23: #{tpu_custom_call.1} parent=1 // pred_check_branch
      %54 = sbr.rel (0) target = $region25
    $region24: #{tpu_custom_call.1} parent=1 // pred_region
      %55 = dma.done [#allocation3], 384
    $region25: #{tpu_custom_call.1} parent=1 // pred_fallthru
      _
    // Predicated region
    $region26: #{tpu_custom_call.1} parent=1 // pred_check
      _
    $region27: #{tpu_custom_call.1} parent=1 // pred_check_branch
      %57 = sbr.rel (0) target = $region29
    $region28: #{tpu_custom_call.1} parent=1 // pred_region
      %58 = dma.done [#allocation6], 4096
    $region29: #{tpu_custom_call.1} parent=1 // pred_fallthru
      _
    // Predicated region
    $region30: #{tpu_custom_call.1} parent=1 // pred_check
      _
    $region31: #{tpu_custom_call.1} parent=1 // pred_check_branch
      %60 = sbr.rel (0) target = $region33
    $region32: #{tpu_custom_call.1} parent=1 // pred_region
      %61 = dma.done [#allocation6], 4096
    $region33: #{tpu_custom_call.1} parent=1 // pred_fallthru
      _
    %v62 = vld [vmem:[#allocation2] sm:$0xff]
    %v63 = vld [vmem:[#allocation2 + $0x8] sm:$0xff]
    %v64 = vld [vmem:[#allocation2 + $0x10] sm:$0xff]
    %v65 = vld [vmem:[#allocation5] sm:$0xff]
    %v66 = vld [vmem:[#allocation5 + $0x8] sm:$0xff]
    %v67 = vld [vmem:[#allocation5 + $0x10] sm:$0xff]
    %v68 = vld [vmem:[#allocation5 + $0x18] sm:$0xff]
    %v69 = vld [vmem:[#allocation5 + $0x20] sm:$0xff]
    %v70 = vld [vmem:[#allocation5 + $0x28] sm:$0xff]
    %v71 = vld [vmem:[#allocation5 + $0x30] sm:$0xff]
    %v72 = vld [vmem:[#allocation5 + $0x38] sm:$0xff]
    %v73 = vld [vmem:[#allocation5 + $0x40] sm:$0xff]
    %v74 = vld [vmem:[#allocation5 + $0x48] sm:$0xff]
    %v75 = vld [vmem:[#allocation5 + $0x50] sm:$0xff]
    %v76 = vld [vmem:[#allocation5 + $0x58] sm:$0xff]
    %v77 = vld [vmem:[#allocation5 + $0x60] sm:$0xff]
    %v78 = vld [vmem:[#allocation5 + $0x68] sm:$0xff]
    %v79 = vld [vmem:[#allocation5 + $0x70] sm:$0xff]
    %v80 = vld [vmem:[#allocation5 + $0x78] sm:$0xff]
    %v81 = vld [vmem:[#allocation5 + $0x80] sm:$0xff]
    %v82 = vld [vmem:[#allocation5 + $0x88] sm:$0xff]
    %v83 = vld [vmem:[#allocation5 + $0x90] sm:$0xff]
    %v84 = vld [vmem:[#allocation5 + $0x98] sm:$0xff]
    %v85 = vld [vmem:[#allocation5 + $0xa0] sm:$0xff]
    %v86 = vld [vmem:[#allocation5 + $0xa8] sm:$0xff]
    %v87 = vld [vmem:[#allocation5 + $0xb0] sm:$0xff]
    %v88 = vld [vmem:[#allocation5 + $0xb8] sm:$0xff]
    %v89 = vld [vmem:[#allocation5 + $0xc0] sm:$0xff]
    %v90 = vld [vmem:[#allocation5 + $0xc8] sm:$0xff]
    %v91 = vld [vmem:[#allocation5 + $0xd0] sm:$0xff]
    %v92 = vld [vmem:[#allocation5 + $0xd8] sm:$0xff]
    %v93 = vld [vmem:[#allocation5 + $0xe0] sm:$0xff]
    %v94 = vld [vmem:[#allocation5 + $0xe8] sm:$0xff]
    %v95 = vld [vmem:[#allocation5 + $0xf0] sm:$0xff]
    %v96 = vld [vmem:[#allocation5 + $0xf8] sm:$0xff]
    %v97 = vld [vmem:[%s2] sm:$0x3]
    %v99 = vlaneseq
    %v100 = vshrl.u32 %v99, 7
    %v101 = vsub.s32 0, %v100
    %v102 = vrot.slane %v97, %v101
    %v103 = vlaneseq
    %v104 = vshrl.u32 %v103, 7
    %v105 = vsub.s32 1, %v104
    %v106 = vrot.slane %v97, %v105
    %109 = vmatprep.subr.mxu0 %v96
    %110 = vmatpush1.msra.mxu0 %v95
    %111 = vmatprep.subr.mxu0 %v94
    %112 = vmatpush1.msra.mxu0 %v93
    %113 = vmatprep.subr.mxu0 %v92
    %114 = vmatpush1.msra.mxu0 %v91
    %115 = vmatprep.subr.mxu0 %v90
    %116 = vmatpush1.msra.mxu0 %v89
    %117 = vmatprep.subr.mxu0 %v88
    %118 = vmatpush1.msra.mxu0 %v87
    %119 = vmatprep.subr.mxu0 %v86
    %120 = vmatpush1.msra.mxu0 %v85
    %121 = vmatprep.subr.mxu0 %v84
    %122 = vmatpush1.msra.mxu0 %v83
    %123 = vmatprep.subr.mxu0 %v82
    %124 = vmatpush1.msra.mxu0 %v81
    %125 = vmatprep.subr.mxu0 %v80
    %126 = vmatpush1.msra.mxu0 %v79
    %127 = vmatprep.subr.mxu0 %v78
    %128 = vmatpush1.msra.mxu0 %v77
    %129 = vmatprep.subr.mxu0 %v76
    %130 = vmatpush1.msra.mxu0 %v75
    %131 = vmatprep.subr.mxu0 %v74
    %132 = vmatpush1.msra.mxu0 %v73
    %133 = vmatprep.subr.mxu0 %v72
    %134 = vmatpush1.msra.mxu0 %v71
    %135 = vmatprep.subr.mxu0 %v70
    %136 = vmatpush1.msra.mxu0 %v69
    %137 = vmatprep.subr.mxu0 %v68
    %138 = vmatpush1.msra.mxu0 %v67
    %139 = vmatprep.subr.mxu0 %v66
    %140 = vmatpush1.msra.mxu0 %v65
    %141 = vmatprep.subr.mxu0 0.0
    %142 = vmatpush2.msra.mxu0 0.0
    %143 = vmatprep.subr.mxu0 0.0
    %144 = vmatpush2.msra.mxu0 0.0
    %145 = vmatprep.subr.mxu0 0.0
    %146 = vmatpush2.msra.mxu0 0.0
    %147 = vmatprep.subr.mxu0 0.0
    %148 = vmatpush2.msra.mxu0 0.0
    %149 = vmatprep.subr.mxu0 0.0
    %150 = vmatpush2.msra.mxu0 0.0
    %151 = vmatprep.subr.mxu0 0.0
    %152 = vmatpush2.msra.mxu0 0.0
    %153 = vmatprep.subr.mxu0 0.0
    %154 = vmatpush2.msra.mxu0 0.0
    %155 = vmatprep.subr.mxu0 0.0
    %156 = vmatpush2.msra.mxu0 0.0
    %157 = vmatprep.subr.mxu0 0.0
    %158 = vmatpush2.msra.mxu0 0.0
    %159 = vmatprep.subr.mxu0 0.0
    %160 = vmatpush2.msra.mxu0 0.0
    %161 = vmatprep.subr.mxu0 0.0
    %162 = vmatpush2.msra.mxu0 0.0
    %163 = vmatprep.subr.mxu0 0.0
    %164 = vmatpush2.msra.mxu0 0.0
    %165 = vmatprep.subr.mxu0 0.0
    %166 = vmatpush2.msra.mxu0 0.0
    %167 = vmatprep.subr.mxu0 0.0
    %168 = vmatpush2.msra.mxu0 0.0
    %169 = vmatprep.subr.mxu0 0.0
    %170 = vmatpush2.msra.mxu0 0.0
    %171 = vmatprep.subr.mxu0 0.0
    %172 = vmatpush2.msra.mxu0 0.0
    %173 = vmatprep.mubr.f32.mxu0 0.0
    %174 = vmatmul.mubr.f32.gmra.mxu0 %v62
    %v175 = vpop.f32.mrf.mxu0
    %v176 = vadd.f32 %v102, %v175
    %v177 = vpop.f32.mrf.mxu0
    %v178 = vadd.f32 %v106, %v177
    %179 = vmatprep.mubr.f32.mxu0 0.0
    %180 = vmatmul.mubr.f32.gmra.mxu0 %v63
    %v181 = vpop.f32.mrf.mxu0
    %v182 = vadd.f32 %v102, %v181
    %v183 = vpop.f32.mrf.mxu0
    %v184 = vadd.f32 %v106, %v183
    %185 = vmatprep.mubr.f32.mxu0 0.0
    %186 = vmatmul.mubr.f32.gmra.mxu0 %v64
    %v187 = vpop.f32.mrf.mxu0
    %v188 = vadd.f32 %v102, %v187
    %v189 = vpop.f32.mrf.mxu0
    %v190 = vadd.f32 %v106, %v189
    %191 = vdwg.mxu0
    %v192 = vmul.f32 %v176, 0.5
    %v193 = vmul.f32 %v182, 0.5
    %v194 = vmul.f32 %v188, 0.5
    %v195 = vtanh.pop %v192
    %v196 = vtanh.pop %v193
    %v197 = vtanh.pop %v194
    %v198 = vmul.f32 %v195, 0.5
    %v199 = vmul.f32 %v196, 0.5
    %v200 = vmul.f32 %v197, 0.5
    %v201 = vadd.f32 %v198, 0.5
    %v202 = vadd.f32 %v199, 0.5
    %v203 = vadd.f32 %v200, 0.5
    %v204 = vmax.f32 %v178, 0.0
    %v205 = vmax.f32 %v184, 0.0
    %v206 = vmax.f32 %v190, 0.0
    %v207 = vsub.f32 %v204, %v62
    %v208 = vsub.f32 %v205, %v63
    %v209 = vsub.f32 %v206, %v64
    %v210 = vmul.f32 %v201, %v207
    %v211 = vmul.f32 %v202, %v208
    %v212 = vmul.f32 %v203, %v209
    %v213 = vadd.f32 %v62, %v210
    %v214 = vadd.f32 %v63, %v211
    %v215 = vadd.f32 %v64, %v212
    %v216 = vld [vmem:[#allocation7] sm:$0xff]
    %v217 = vld [vmem:[#allocation7 + $0x8] sm:$0xff]
    %v218 = vld [vmem:[#allocation7 + $0x10] sm:$0xff]
    %v219 = vld [vmem:[#allocation7 + $0x18] sm:$0xff]
    %v220 = vld [vmem:[#allocation7 + $0x20] sm:$0xff]
    %v221 = vld [vmem:[#allocation7 + $0x28] sm:$0xff]
    %v222 = vld [vmem:[#allocation7 + $0x30] sm:$0xff]
    %v223 = vld [vmem:[#allocation7 + $0x38] sm:$0xff]
    %v224 = vld [vmem:[#allocation7 + $0x40] sm:$0xff]
    %v225 = vld [vmem:[#allocation7 + $0x48] sm:$0xff]
    %v226 = vld [vmem:[#allocation7 + $0x50] sm:$0xff]
    %v227 = vld [vmem:[#allocation7 + $0x58] sm:$0xff]
    %v228 = vld [vmem:[#allocation7 + $0x60] sm:$0xff]
    %v229 = vld [vmem:[#allocation7 + $0x68] sm:$0xff]
    %v230 = vld [vmem:[#allocation7 + $0x70] sm:$0xff]
    %v231 = vld [vmem:[#allocation7 + $0x78] sm:$0xff]
    %v232 = vld [vmem:[#allocation7 + $0x80] sm:$0xff]
    %v233 = vld [vmem:[#allocation7 + $0x88] sm:$0xff]
    %v234 = vld [vmem:[#allocation7 + $0x90] sm:$0xff]
    %v235 = vld [vmem:[#allocation7 + $0x98] sm:$0xff]
    %v236 = vld [vmem:[#allocation7 + $0xa0] sm:$0xff]
    %v237 = vld [vmem:[#allocation7 + $0xa8] sm:$0xff]
    %v238 = vld [vmem:[#allocation7 + $0xb0] sm:$0xff]
    %v239 = vld [vmem:[#allocation7 + $0xb8] sm:$0xff]
    %v240 = vld [vmem:[#allocation7 + $0xc0] sm:$0xff]
    %v241 = vld [vmem:[#allocation7 + $0xc8] sm:$0xff]
    %v242 = vld [vmem:[#allocation7 + $0xd0] sm:$0xff]
    %v243 = vld [vmem:[#allocation7 + $0xd8] sm:$0xff]
    %v244 = vld [vmem:[#allocation7 + $0xe0] sm:$0xff]
    %v245 = vld [vmem:[#allocation7 + $0xe8] sm:$0xff]
    %v246 = vld [vmem:[#allocation7 + $0xf0] sm:$0xff]
    %v247 = vld [vmem:[#allocation7 + $0xf8] sm:$0xff]
    %v248 = vld [vmem:[%s4] sm:$0x3]
    %v250 = vlaneseq
    %v251 = vshrl.u32 %v250, 7
    %v252 = vsub.s32 0, %v251
    %v253 = vrot.slane %v248, %v252
    %v254 = vlaneseq
    %v255 = vshrl.u32 %v254, 7
    %v256 = vsub.s32 1, %v255
    %v257 = vrot.slane %v248, %v256
    %260 = vmatprep.subr.mxu0 %v247
    %261 = vmatpush1.msra.mxu0 %v246
    %262 = vmatprep.subr.mxu0 %v245
    %263 = vmatpush1.msra.mxu0 %v244
    %264 = vmatprep.subr.mxu0 %v243
    %265 = vmatpush1.msra.mxu0 %v242
    %266 = vmatprep.subr.mxu0 %v241
    %267 = vmatpush1.msra.mxu0 %v240
    %268 = vmatprep.subr.mxu0 %v239
    %269 = vmatpush1.msra.mxu0 %v238
    %270 = vmatprep.subr.mxu0 %v237
    %271 = vmatpush1.msra.mxu0 %v236
    %272 = vmatprep.subr.mxu0 %v235
    %273 = vmatpush1.msra.mxu0 %v234
    %274 = vmatprep.subr.mxu0 %v233
    %275 = vmatpush1.msra.mxu0 %v232
    %276 = vmatprep.subr.mxu0 %v231
    %277 = vmatpush1.msra.mxu0 %v230
    %278 = vmatprep.subr.mxu0 %v229
    %279 = vmatpush1.msra.mxu0 %v228
    %280 = vmatprep.subr.mxu0 %v227
    %281 = vmatpush1.msra.mxu0 %v226
    %282 = vmatprep.subr.mxu0 %v225
    %283 = vmatpush1.msra.mxu0 %v224
    %284 = vmatprep.subr.mxu0 %v223
    %285 = vmatpush1.msra.mxu0 %v222
    %286 = vmatprep.subr.mxu0 %v221
    %287 = vmatpush1.msra.mxu0 %v220
    %288 = vmatprep.subr.mxu0 %v219
    %289 = vmatpush1.msra.mxu0 %v218
    %290 = vmatprep.subr.mxu0 %v217
    %291 = vmatpush1.msra.mxu0 %v216
    %292 = vmatprep.subr.mxu0 0.0
    %293 = vmatpush2.msra.mxu0 0.0
    %294 = vmatprep.subr.mxu0 0.0
    %295 = vmatpush2.msra.mxu0 0.0
    %296 = vmatprep.subr.mxu0 0.0
    %297 = vmatpush2.msra.mxu0 0.0
    %298 = vmatprep.subr.mxu0 0.0
    %299 = vmatpush2.msra.mxu0 0.0
    %300 = vmatprep.subr.mxu0 0.0
    %301 = vmatpush2.msra.mxu0 0.0
    %302 = vmatprep.subr.mxu0 0.0
    %303 = vmatpush2.msra.mxu0 0.0
    %304 = vmatprep.subr.mxu0 0.0
    %305 = vmatpush2.msra.mxu0 0.0
    %306 = vmatprep.subr.mxu0 0.0
    %307 = vmatpush2.msra.mxu0 0.0
    %308 = vmatprep.subr.mxu0 0.0
    %309 = vmatpush2.msra.mxu0 0.0
    %310 = vmatprep.subr.mxu0 0.0
    %311 = vmatpush2.msra.mxu0 0.0
    %312 = vmatprep.subr.mxu0 0.0
    %313 = vmatpush2.msra.mxu0 0.0
    %314 = vmatprep.subr.mxu0 0.0
    %315 = vmatpush2.msra.mxu0 0.0
    %316 = vmatprep.subr.mxu0 0.0
    %317 = vmatpush2.msra.mxu0 0.0
    %318 = vmatprep.subr.mxu0 0.0
    %319 = vmatpush2.msra.mxu0 0.0
    %320 = vmatprep.subr.mxu0 0.0
    %321 = vmatpush2.msra.mxu0 0.0
    %322 = vmatprep.subr.mxu0 0.0
    %323 = vmatpush2.msra.mxu0 0.0
    %324 = vmatprep.mubr.f32.mxu0 0.0
    %325 = vmatmul.mubr.f32.gmra.mxu0 %v213
    %v326 = vpop.f32.mrf.mxu0
    %v327 = vadd.f32 %v253, %v326
    %v328 = vpop.f32.mrf.mxu0
    %v329 = vadd.f32 %v257, %v328
    %330 = vmatprep.mubr.f32.mxu0 0.0
    %331 = vmatmul.mubr.f32.gmra.mxu0 %v214
    %v332 = vpop.f32.mrf.mxu0
    %v333 = vadd.f32 %v253, %v332
    %v334 = vpop.f32.mrf.mxu0
    %v335 = vadd.f32 %v257, %v334
    %336 = vmatprep.mubr.f32.mxu0 0.0
    %337 = vmatmul.mubr.f32.gmra.mxu0 %v215
    %v338 = vpop.f32.mrf.mxu0
    %v339 = vadd.f32 %v253, %v338
    %v340 = vpop.f32.mrf.mxu0
    %v341 = vadd.f32 %v257, %v340
    %342 = vdwg.mxu0
    %v343 = vmul.f32 %v327, 0.5
    %v344 = vmul.f32 %v333, 0.5
    %v345 = vmul.f32 %v339, 0.5
    %v346 = vtanh.pop %v343
    %v347 = vtanh.pop %v344
    %v348 = vtanh.pop %v345
    %v349 = vmul.f32 %v346, 0.5
    %v350 = vmul.f32 %v347, 0.5
    %v351 = vmul.f32 %v348, 0.5
    %v352 = vadd.f32 %v349, 0.5
    %v353 = vadd.f32 %v350, 0.5
    %v354 = vadd.f32 %v351, 0.5
    %v355 = vmax.f32 %v329, 0.0
    %v356 = vmax.f32 %v335, 0.0
    %v357 = vmax.f32 %v341, 0.0
    %v358 = vsub.f32 %v355, %v213
    %v359 = vsub.f32 %v356, %v214
    %v360 = vsub.f32 %v357, %v215
    %v361 = vmul.f32 %v352, %v358
    %v362 = vmul.f32 %v353, %v359
    %v363 = vmul.f32 %v354, %v360
    %v364 = vadd.f32 %v213, %v361
    %v365 = vadd.f32 %v214, %v362
    %v366 = vadd.f32 %v215, %v363
    %367 = vst [vmem:[#allocation8] sm:$0xff] %v364
    %368 = vst [vmem:[#allocation8 + $0x8] sm:$0xff] %v365
    %369 = vst [vmem:[#allocation8 + $0x10] sm:$0xff] %v366
    // Predicated region
    $region34: #{tpu_custom_call.1} parent=1 // pred_check
      _
    $region35: #{tpu_custom_call.1} parent=1 // pred_check_branch
      %371 = sbr.rel (0) target = $region37
    $region36: #{tpu_custom_call.1} parent=1 // pred_region
      %s373 = ssub.s32 384, 384
      %374 = vsyncadd [#allocation4], %s373
      %s375 = sshll.u32 [#allocation8], 4
      %s376 = int_to_ptr.vmem [resolvable:$true] %s375
      %381 = dma.vmem_to_hbm [thread:$0]  %s376, 384, %s5, [#allocation4], 128, 128, 8
    $region37: #{tpu_custom_call.1} parent=1 // pred_fallthru
      _
    // Predicated region
    $region38: #{tpu_custom_call.1} parent=1 // pred_check
      _
    $region39: #{tpu_custom_call.1} parent=1 // pred_check_branch
      %383 = sbr.rel (0) target = $region41
    $region40: #{tpu_custom_call.1} parent=1 // pred_region
      %384 = dma.done [#allocation4], 384
    $region41: #{tpu_custom_call.1} parent=1 // pred_fallthru
      _
    %385 = vsyncpa [#allocation3], 1
    %386 = vsyncpa [#allocation6], 1
    %387 = vsyncpa [#allocation4], 1

</llo_original>
